<compile_context>
chip_gen: v7x
topology: tpu7x:2x2x1
jax: 0.10.0
libtpu: 0.0.40
codegen_flags: <defaults>
</compile_context>

<pallas_src>
import functools

import jax
import jax.numpy as jnp
from jax import lax
from jax.experimental import pallas as pl
from jax.experimental.pallas import tpu as pltpu


# --------------------------------------------------------------------------
# tiling helper
# --------------------------------------------------------------------------
def _choose_sublane_tile(P, cap=32):
    """Pick TP dividing P with TP % 8 == 0 (or TP == P), TP <= cap."""
    if P <= cap:
        return P
    t = (cap // 8) * 8
    while t >= 8:
        if P % t == 0:
            return t
        t -= 8
    return P


# --------------------------------------------------------------------------
# Kernel 1: homogeneous vertex transform  (torch.bmm(F.pad(v, value=1), mvp^T))
#   vertices sit on the 128-lane axis (lane-dense in/out), mvp scalars in SMEM.
# --------------------------------------------------------------------------
def _vclip_kernel(mvp_ref, v_ref, out_ref):
    b = pl.program_id(0)
    x = v_ref[0:1, :]
    y = v_ref[1:2, :]
    z = v_ref[2:3, :]
    for j in range(4):
        m0 = mvp_ref[b * 16 + j * 4 + 0]
        m1 = mvp_ref[b * 16 + j * 4 + 1]
        m2 = mvp_ref[b * 16 + j * 4 + 2]
        m3 = mvp_ref[b * 16 + j * 4 + 3]
        # homogeneous pad with 1.0 folds into the +m3 term (4x4 matmul is far
        # too small for the MXU; scalar-broadcast MACs on the VPU instead).
        out_ref[0, j:j + 1, :] = x * m0 + y * m1 + z * m2 + m3


def vertex_transform(v, mvp):
    B = mvp.shape[0]
    V = v.shape[0]
    out = pl.pallas_call(
        _vclip_kernel,
        out_shape=jax.ShapeDtypeStruct((B, 4, V), jnp.float32),
        grid=(B,),
        in_specs=[
            pl.BlockSpec(memory_space=pltpu.MemorySpace.SMEM),
            pl.BlockSpec((3, V), lambda b: (0, 0)),
        ],
        out_specs=pl.BlockSpec((1, 4, V), lambda b: (b, 0, 0)),
        compiler_params=pltpu.CompilerParams(dimension_semantics=("parallel",)),
    )(mvp.reshape(-1).astype(jnp.float32), v.T.astype(jnp.float32))
    return jnp.transpose(out, (0, 2, 1))  # [B, V, 4]


# --------------------------------------------------------------------------
# Face setup (plain JAX, vectorized over B x F): done ONCE per face instead of
# once per face per pixel-tile.  Produces a packed 9-coefficient table so the
# raster kernel only evaluates two affine edge functions + one z plane.
# --------------------------------------------------------------------------
def face_setup(v_clip, faces, eps_w=1e-6):
    tri = v_clip[:, faces, :]                       # [B, F, 3, 4]
    wc = tri[..., 3]                                # [B, F, 3]
    w_ok = jnp.all(wc > eps_w, axis=-1)
    # TODO(synk): nvdiffrast clips triangles crossing the w=0 / near plane;
    # here such triangles are skipped (poisoned) instead of clipped.
    iw = 1.0 / jnp.where(wc > eps_w, wc, 1.0)       # [B, F, 3]
    ndc = tri[..., :3] * iw[..., None]              # [B, F, 3, 3]
    x = ndc[..., 0]
    y = ndc[..., 1]
    z = ndc[..., 2]
    x0, x1, x2 = x[..., 0], x[..., 1], x[..., 2]
    y0, y1, y2 = y[..., 0], y[..., 1], y[..., 2]
    z0, z1, z2 = z[..., 0], z[..., 1], z[..., 2]

    e0x = y1 - y2
    e0y = x2 - x1
    e1x = y2 - y0
    e1y = x0 - x2
    d = e0x * (x0 - x2) + e0y * (y0 - y2)
    d_ok = jnp.abs(d) > 1e-12
    valid = w_ok & d_ok
    inv_d = 1.0 / jnp.where(d_ok, d, 1.0)
    c00 = e0x * inv_d
    c01 = e0y * inv_d
    c10 = e1x * inv_d
    c11 = e1y * inv_d
    k0 = -(c00 * x2 + c01 * y2)
    k1 = -(c10 * x2 + c11 * y2)
    # z(px,py) = b0*z0 + b1*z1 + (1-b0-b1)*z2 is affine in screen space:
    dz0 = z0 - z2
    dz1 = z1 - z2
    za = c00 * dz0 + c10 * dz1
    zb = c01 * dz0 + c11 * dz1
    zc = k0 * dz0 + k1 * dz1 + z2

    # poison invalid faces so no pixel can ever pass the inside test
    c00 = jnp.where(valid, c00, 0.0)
    c01 = jnp.where(valid, c01, 0.0)
    k0 = jnp.where(valid, k0, -1.0)

    coef = jnp.stack([c00, c01, k0, c10, c11, k1, za, zb, zc],
                     axis=-1).astype(jnp.float32)        # [B, F, 9]
    bbox = (x.min(-1), x.max(-1), y.min(-1), y.max(-1))  # NDC bbox, [B, F] each
    return coef, iw.astype(jnp.float32), valid, bbox


def build_face_lists(bbox, valid, H, W, T, TP, U):
    """Per (batch, pixel-tile) compacted face-id lists + counts for culling."""
    xmin, xmax, ymin, ymax = bbox
    B, F = valid.shape
    tiles = jnp.arange(T, dtype=jnp.int32)
    p0 = tiles * (TP * 128)
    p1 = (tiles + 1) * (TP * 128) - 1
    r0 = (p0 // W).astype(jnp.float32)
    r1 = (p1 // W).astype(jnp.float32)
    ty_lo = (r0 + 0.5) * (2.0 / H) - 1.0
    ty_hi = (r1 + 0.5) * (2.0 / H) - 1.0
    tx_lo = 0.5 * (2.0 / W) - 1.0
    tx_hi = (W - 0.5) * (2.0 / W) - 1.0
    overlap = ((ymin[:, None, :] <= ty_hi[None, :, None]) &
               (ymax[:, None, :] >= ty_lo[None, :, None]) &
               (xmin[:, None, :] <= tx_hi) &
               (xmax[:, None, :] >= tx_lo) &
               valid[:, None, :])                                # [B, T, F]
    counts = overlap.sum(axis=-1).astype(jnp.int32)              # [B, T]
    # stable argsort of 0/1 keys = compaction that preserves face order
    order = jnp.argsort(jnp.where(overlap, 0, 1), axis=-1).astype(jnp.int32)
    keep = jnp.arange(F, dtype=jnp.int32)[None, None, :] < counts[..., None]
    ids = jnp.where(keep, order, F)                              # poison id = F
    Fpad = ((F + U - 1) // U) * U
    if Fpad > F:
        ids = jnp.concatenate(
            [ids, jnp.full((B, T, Fpad - F), F, jnp.int32)], axis=-1)
    # TODO(synk): for very large meshes the SMEM face tables/lists should be
    # capped / streamed in face chunks; fine at typical mesh sizes per tile.
    return counts.reshape(-1), ids.reshape(-1), Fpad


# --------------------------------------------------------------------------
# Kernel 2: pixel-tiled rasterizer with per-tile face culling + deferred
# attribute interpolation.  Loop carries only depth + winning face id (VMEM
# scratch); the trip count is the per-tile culled face count.
# --------------------------------------------------------------------------
def _raster_kernel(coef_ref, cnt_ref, ids_ref, out_ref, zbuf, fbuf,
                   *, H, W, TP, T, Fpad, Fcoef, U):
    t = pl.program_id(0)
    b = pl.program_id(1)

    row = lax.broadcasted_iota(jnp.int32, (TP, 128), 0)
    lane = lax.broadcasted_iota(jnp.int32, (TP, 128), 1)
    idx = (t * TP + row) * 128 + lane
    px = ((idx % W).astype(jnp.float32) + 0.5) * (2.0 / W) - 1.0
    py = ((idx // W).astype(jnp.float32) + 0.5) * (2.0 / H) - 1.0

    zbuf[...] = jnp.full((TP, 128), 1e30, jnp.float32)
    fbuf[...] = jnp.full((TP, 128), -1.0, jnp.float32)

    count = cnt_ref[b * T + t]
    nchunks = (count + (U - 1)) // U
    id_base = (b * T + t) * Fpad
    cf_base = b * Fcoef * 9

    @pl.loop(0, nchunks)
    def _(c):
        for u in range(U):   # manual 2x unroll; ids are padded with poison face
            fi = ids_ref[id_base + c * U + u]
            base = cf_base + fi * 9
            c00 = coef_ref[base + 0]
            c01 = coef_ref[base + 1]
            k0 = coef_ref[base + 2]
            c10 = coef_ref[base + 3]
            c11 = coef_ref[base + 4]
            k1 = coef_ref[base + 5]
            za = coef_ref[base + 6]
            zb = coef_ref[base + 7]
            zc = coef_ref[base + 8]

            b0 = px * c00 + py * c01 + k0
            b1 = px * c10 + py * c11 + k1
            b2 = 1.0 - b0 - b1
            z = px * za + py * zb + zc

            best_z = zbuf[...]
            closer = (b0 >= 0.0) & (b1 >= 0.0) & (b2 >= 0.0) & (z < best_z)
            zbuf[...] = jnp.where(closer, z, best_z)
            fbuf[...] = jnp.where(closer, fi.astype(jnp.float32), fbuf[...])

    covered = (zbuf[...] < 1e30).astype(jnp.float32)  # == interpolate(ones)
    out_ref[0, 0, :, :] = fbuf[...]
    out_ref[0, 1, :, :] = covered


def rasterize(coef_flat, counts_flat, ids_flat, B, H, W, T, TP, Fpad, Fcoef, U):
    P = (H * W) // 128
    return pl.pallas_call(
        functools.partial(_raster_kernel, H=H, W=W, TP=TP, T=T,
                          Fpad=Fpad, Fcoef=Fcoef, U=U),
        out_shape=jax.ShapeDtypeStruct((B, 2, P, 128), jnp.float32),
        grid=(T, B),
        in_specs=[pl.BlockSpec(memory_space=pltpu.MemorySpace.SMEM)] * 3,
        out_specs=pl.BlockSpec((1, 2, TP, 128), lambda t, b: (b, 0, t, 0)),
        scratch_shapes=[pltpu.VMEM((TP, 128), jnp.float32),
                        pltpu.VMEM((TP, 128), jnp.float32)],
        compiler_params=pltpu.CompilerParams(
            dimension_semantics=("parallel", "parallel")),
    )(coef_flat, counts_flat, ids_flat)


# --------------------------------------------------------------------------
# Kernel 3: elementwise shading / normal remap / clamps in the dense
# [B, C, P, 128] layout (fully packed vregs, no channel-slice transposes).
# --------------------------------------------------------------------------
def _shade_kernel(light_ref, nrm_ref, alb_ref, alp_ref,
                  col_out, nrm_out, alp_out, *, mode, ambient_ratio):
    n = nrm_ref[0]        # (3, TPs, 128)
    al = alp_ref[0]       # (1, TPs, 128)
    nrm_vis = jnp.clip((n + 1.0) * 0.5, 0.0, 1.0)
    if mode == "normal":
        color = nrm_vis
    else:
        a = jnp.where(al > 0.0, alb_ref[0], 0.0)   # get_2d_texture masking
        if mode == "rgb":
            color = jnp.clip(a, 0.0, 1.0)
        else:  # lambertian: ambient + (1-ambient)*clamp(n . light_d, 0)
            ndl = (n[0:1] * light_ref[0] + n[1:2] * light_ref[1]
                   + n[2:3] * light_ref[2])
            lamb = ambient_ratio + (1.0 - ambient_ratio) * jnp.maximum(ndl, 0.0)
            color = jnp.clip(a * lamb, 0.0, 1.0)
    # TODO(synk): dr.antialias (analytic silhouette anti-aliasing) has no Pallas
    # equivalent; only the .clamp(0, 1) is applied here.
    col_out[0] = color
    nrm_out[0] = nrm_vis
    alp_out[0] = jnp.clip(al, 0.0, 1.0)


def shade(light_d, nrm4, alb4, alp4, mode, ambient_ratio):
    B, _, P, _ = nrm4.shape
    TPs = _choose_sublane_tile(P, cap=256)
    T = P // TPs
    return pl.pallas_call(
        functools.partial(_shade_kernel, mode=mode,
                          ambient_ratio=float(ambient_ratio)),
        out_shape=(jax.ShapeDtypeStruct((B, 3, P, 128), jnp.float32),
                   jax.ShapeDtypeStruct((B, 3, P, 128), jnp.float32),
                   jax.ShapeDtypeStruct((B, 1, P, 128), jnp.float32)),
        grid=(T, B),
        in_specs=[pl.BlockSpec(memory_space=pltpu.MemorySpace.SMEM),
                  pl.BlockSpec((1, 3, TPs, 128), lambda t, b: (b, 0, t, 0)),
                  pl.BlockSpec((1, 3, TPs, 128), lambda t, b: (b, 0, t, 0)),
                  pl.BlockSpec((1, 1, TPs, 128), lambda t, b: (b, 0, t, 0))],
        out_specs=(pl.BlockSpec((1, 3, TPs, 128), lambda t, b: (b, 0, t, 0)),
                   pl.BlockSpec((1, 3, TPs, 128), lambda t, b: (b, 0, t, 0)),
                   pl.BlockSpec((1, 1, TPs, 128), lambda t, b: (b, 0, t, 0))),
        compiler_params=pltpu.CompilerParams(
            dimension_semantics=("parallel", "parallel")),
    )(light_d, nrm4, alb4, alp4)


# --------------------------------------------------------------------------
# Plain-JAX glue
# --------------------------------------------------------------------------
def compute_normal(verts, faces):
    """utils.compute_normal equivalent: area-weighted vertex normals."""
    v0 = verts[faces[:, 0]]
    v1 = verts[faces[:, 1]]
    v2 = verts[faces[:, 2]]
    fn = jnp.cross(v1 - v0, v2 - v0)
    vn = jnp.zeros_like(verts)
    vn = vn.at[faces[:, 0]].add(fn).at[faces[:, 1]].add(fn).at[faces[:, 2]].add(fn)
    return vn / (jnp.linalg.norm(vn, axis=-1, keepdims=True) + 1e-20)


def bilinear_sample_planes(tex, u, v):
    """Bilinear texture lookup (clamp addressing), channel-major output.
    tex: [Th, Tw, 3], u/v: [B, N] -> [B, 3, N] (no NHWC->NCHW transpose)."""
    Th, Tw = tex.shape[:2]
    fx = u * Tw - 0.5
    fy = v * Th - 0.5
    x0 = jnp.floor(fx)
    y0 = jnp.floor(fy)
    wx = fx - x0
    wy = fy - y0
    x0i = jnp.clip(x0.astype(jnp.int32), 0, Tw - 1)
    x1i = jnp.clip(x0i + 1, 0, Tw - 1)
    y0i = jnp.clip(y0.astype(jnp.int32), 0, Th - 1)
    y1i = jnp.clip(y0i + 1, 0, Th - 1)
    chans = []
    for c in range(tex.shape[2]):
        tc = tex[..., c]
        c00 = tc[y0i, x0i]
        c01 = tc[y0i, x1i]
        c10 = tc[y1i, x0i]
        c11 = tc[y1i, x1i]
        chans.append(c00 * (1 - wx) * (1 - wy) + c01 * wx * (1 - wy)
                     + c10 * (1 - wx) * wy + c11 * wx * wy)
    return jnp.stack(chans, axis=1)


class Mesh:
    def __init__(self, v, f, vn, vt, ft, albedo):
        self.v, self.f, self.vn, self.vt, self.ft, self.albedo = v, f, vn, vt, ft, albedo


class Renderer:
    def __init__(self, gui=False):
        pass  # no RasterizeCudaContext needed; rasterization is done in-kernel

    def forward(self, mesh, mvp, h=512, w=512, light_d=None, ambient_ratio=1.0,
                mode="rgb", spp=1, is_train=False):
        if spp > 1:
            # TODO(synk): spp>1 supersampling + scale_img_nhwc downsample not implemented.
            raise NotImplementedError("spp > 1 not supported")
        B = mvp.shape[0]
        F_ = mesh.f.shape[0]
        N = h * w
        assert N % 128 == 0, "h*w must be a multiple of 128 for lane-dense layout"
        P = N // 128

        # v_clip = bmm(pad(v, 1), mvp^T)   -- Pallas kernel 1
        v_clip = vertex_transform(mesh.v, mvp)                      # [B, V, 4]

        vn = compute_normal(v_clip[0, :, :3], mesh.f) if is_train else mesh.vn

        # per-face setup done once (JAX), packed coefficient table for the kernel
        coef, iw, valid, bbox = face_setup(v_clip, mesh.f)          # coef [B,F,9]

        TP = _choose_sublane_tile(P, cap=32)
        T = P // TP
        U = 2
        counts_flat, ids_flat, Fpad = build_face_lists(bbox, valid, h, w, T, TP, U)

        # append one poison face (never inside) used for loop padding
        poison = jnp.zeros((B, 1, 9), jnp.float32).at[..., 2].set(-1.0)
        coef_pad = jnp.concatenate([coef, poison], axis=1)          # [B, F+1, 9]

        # culled rasterization + z-test  -- Pallas kernel 2
        raster = rasterize(coef_pad.reshape(-1), counts_flat, ids_flat,
                           B, h, w, T, TP, Fpad, F_ + 1, U)         # [B, 2, P, 128]
        r = raster.reshape(B, 2, N)
        fidf = r[:, 0]
        cov = r[:, 1]

        # deferred perspective-correct attribute interpolation (winning face only)
        fid = jnp.clip(fidf.astype(jnp.int32), 0, F_ - 1)           # [B, N]
        pix = jnp.arange(N, dtype=jnp.int32)
        pxf = ((pix % w).astype(jnp.float32) + 0.5) * (2.0 / w) - 1.0
        pyf = ((pix // w).astype(jnp.float32) + 0.5) * (2.0 / h) - 1.0
        bix = jnp.arange(B)[:, None]
        cg = coef[bix, fid]                                         # [B, N, 9]
        b0 = pxf * cg[..., 0] + pyf * cg[..., 1] + cg[..., 2]
        b1 = pxf * cg[..., 3] + pyf * cg[..., 4] + cg[..., 5]
        b2 = 1.0 - b0 - b1
        iwg = iw[bix, fid]                                          # [B, N, 3]
        pw = b0 * iwg[..., 0] + b1 * iwg[..., 1] + b2 * iwg[..., 2]
        inv_pw = 1.0 / jnp.where(cov > 0.0, pw, 1.0)
        uq = b0 * iwg[..., 0] * inv_pw
        vq = b1 * iwg[..., 1] * inv_pw
        wq = 1.0 - uq - vq

        fn = vn[mesh.f].astype(jnp.float32)                         # [F, 3, 3]
        fng = fn[fid]                                               # [B, N, 3, 3]
        nx = (uq * fng[..., 0, 0] + vq * fng[..., 1, 0] + wq * fng[..., 2, 0]) * cov
        ny = (uq * fng[..., 0, 1] + vq * fng[..., 1, 1] + wq * fng[..., 2, 1]) * cov
        nz = (uq * fng[..., 0, 2] + vq * fng[..., 1, 2] + wq * fng[..., 2, 2]) * cov
        nrm4 = jnp.stack([nx, ny, nz], axis=1).reshape(B, 3, P, 128)

        if mode != "normal":
            fuv = mesh.vt[mesh.ft].astype(jnp.float32)              # [F, 3, 2]
            fuvg = fuv[fid]                                         # [B, N, 3, 2]
            tu = (uq * fuvg[..., 0, 0] + vq * fuvg[..., 1, 0] + wq * fuvg[..., 2, 0]) * cov
            tv = (uq * fuvg[..., 0, 1] + vq * fuvg[..., 1, 1] + wq * fuvg[..., 2, 1]) * cov
            # TODO(synk): dr.texture 'linear-mipmap-linear' (mipmaps + uv_da) has no
            # Pallas equivalent; plain bilinear sampling via XLA gathers here.
            alb4 = bilinear_sample_planes(mesh.albedo, tu, tv).reshape(B, 3, P, 128)
        else:
            alb4 = nrm4   # placeholder input (unused for mode='normal')

        if light_d is None:
            light_d = jnp.zeros((3,), jnp.float32)

        alp4 = cov.reshape(B, 1, P, 128)

        # shading + clamps  -- Pallas kernel 3 (dense channel-plane layout)
        color, normal, alpha = shade(light_d.astype(jnp.float32).reshape(-1),
                                     nrm4, alb4, alp4, mode, ambient_ratio)

        def to_nhwc(x):
            C = x.shape[1]
            return jnp.transpose(x.reshape(B, C, N), (0, 2, 1)).reshape(B, h, w, C)

        return {"image": to_nhwc(color),
                "normal": to_nhwc(normal),
                "alpha": to_nhwc(alpha)}


if __name__ == "__main__":
    key = jax.random.PRNGKey(0)
    k_tex, k_mvp, k_light = jax.random.split(key, 3)

    B, h, w = 2, 16, 16
    # simple mesh: two parallel quads (8 vertices, 4 triangles)
    v = jnp.array([[-0.8, -0.8, 0.2], [0.8, -0.8, 0.2], [0.8, 0.8, 0.2], [-0.8, 0.8, 0.2],
                   [-0.4, -0.4, -0.1], [0.4, -0.4, -0.1], [0.4, 0.4, -0.1], [-0.4, 0.4, -0.1]],
                  dtype=jnp.float32)
    f = jnp.array([[0, 1, 2], [0, 2, 3], [4, 5, 6], [4, 6, 7]], dtype=jnp.int32)
    vn = jnp.tile(jnp.array([[0.0, 0.0, 1.0]], jnp.float32), (8, 1))
    vt = jnp.array([[0.0, 0.0], [1.0, 0.0], [1.0, 1.0], [0.0, 1.0]] * 2, dtype=jnp.float32)
    ft = f
    albedo_tex = jax.random.uniform(k_tex, (8, 8, 3), dtype=jnp.float32)
    mesh = Mesh(v=v, f=f, vn=vn, vt=vt, ft=ft, albedo=albedo_tex)

    mvp = (jnp.broadcast_to(jnp.eye(4, dtype=jnp.float32), (B, 4, 4))
           + 0.01 * jax.random.normal(k_mvp, (B, 4, 4), dtype=jnp.float32))
    light_d = jax.random.normal(k_light, (3,), dtype=jnp.float32)
    light_d = light_d / jnp.linalg.norm(light_d)

    renderer = Renderer()
    out_rgb = renderer.forward(mesh, mvp, h=h, w=w)                       # default mode='rgb'
    out_lam = renderer.forward(mesh, mvp, h=h, w=w, light_d=light_d,
                               ambient_ratio=0.3, mode="lambertian")
    out_nrm = renderer.forward(mesh, mvp, h=h, w=w, mode="normal")

    for o in (out_rgb, out_lam, out_nrm):
        for arr in o.values():
            jax.block_until_ready(arr)

    assert out_rgb["image"].shape == (B, h, w, 3)
    assert out_rgb["normal"].shape == (B, h, w, 3)
    assert out_rgb["alpha"].shape == (B, h, w, 1)
    assert bool(jnp.all(jnp.isfinite(out_rgb["image"])))
    assert float(out_rgb["alpha"].sum()) > 0.0   # something was rasterized
    print("KERNEL_OK")
</pallas_src>

<mosaic_0001>
module attributes {stable_mosaic.version = 11 : i64} {
  func.func @_vclip_kernel(%arg0: i32, %arg1: memref<32xf32, #tpu.memory_space<smem>>, %arg2: memref<3x8xf32, #tpu.memory_space<vmem>>, %arg3: memref<1x4x8xf32, #tpu.memory_space<vmem>>) attributes {dimension_semantics = [#tpu.dimension_semantics<parallel>], iteration_bounds = array<i64: 2>, scalar_prefetch = 0 : i64, scratch_operands = 0 : i64, tpu.core_type = #tpu.core_type<tc>, window_params = [{transform_indices = @transform_0, window_bounds = array<i64: 32>}, {pipeline_mode = #tpu.pipeline_mode<synchronous>, transform_indices = @transform_1, window_bounds = array<i64: 3, 8>}, {transform_indices = @transform_2, window_bounds = array<i64: 1, 4, 8>}]} {
    %c0 = arith.constant 0 : index
    %c0_0 = arith.constant 0 : index
    %0 = vector.load %arg2[%c0, %c0_0] : memref<3x8xf32, #tpu.memory_space<vmem>>, vector<1x8xf32>
    %c1 = arith.constant 1 : index
    %c0_1 = arith.constant 0 : index
    %1 = vector.load %arg2[%c1, %c0_1] : memref<3x8xf32, #tpu.memory_space<vmem>>, vector<1x8xf32>
    %c2 = arith.constant 2 : index
    %c0_2 = arith.constant 0 : index
    %2 = vector.load %arg2[%c2, %c0_2] : memref<3x8xf32, #tpu.memory_space<vmem>>, vector<1x8xf32>
    %c16_i32 = arith.constant 16 : i32
    %3 = arith.muli %arg0, %c16_i32 : i32
    %c0_i32 = arith.constant 0 : i32
    %4 = arith.addi %3, %c0_i32 : i32
    %c0_i32_3 = arith.constant 0 : i32
    %5 = arith.addi %4, %c0_i32_3 : i32
    %6 = arith.index_cast %5 : i32 to index
    %7 = memref.load %arg1[%6] : memref<32xf32, #tpu.memory_space<smem>>
    %c16_i32_4 = arith.constant 16 : i32
    %8 = arith.muli %arg0, %c16_i32_4 : i32
    %c0_i32_5 = arith.constant 0 : i32
    %9 = arith.addi %8, %c0_i32_5 : i32
    %c1_i32 = arith.constant 1 : i32
    %10 = arith.addi %9, %c1_i32 : i32
    %11 = arith.index_cast %10 : i32 to index
    %12 = memref.load %arg1[%11] : memref<32xf32, #tpu.memory_space<smem>>
    %c16_i32_6 = arith.constant 16 : i32
    %13 = arith.muli %arg0, %c16_i32_6 : i32
    %c0_i32_7 = arith.constant 0 : i32
    %14 = arith.addi %13, %c0_i32_7 : i32
    %c2_i32 = arith.constant 2 : i32
    %15 = arith.addi %14, %c2_i32 : i32
    %16 = arith.index_cast %15 : i32 to index
    %17 = memref.load %arg1[%16] : memref<32xf32, #tpu.memory_space<smem>>
    %c16_i32_8 = arith.constant 16 : i32
    %18 = arith.muli %arg0, %c16_i32_8 : i32
    %c0_i32_9 = arith.constant 0 : i32
    %19 = arith.addi %18, %c0_i32_9 : i32
    %c3_i32 = arith.constant 3 : i32
    %20 = arith.addi %19, %c3_i32 : i32
    %21 = arith.index_cast %20 : i32 to index
    %22 = memref.load %arg1[%21] : memref<32xf32, #tpu.memory_space<smem>>
    %23 = vector.broadcast %7 : f32 to vector<1x8xf32>
    %24 = arith.mulf %0, %23 : vector<1x8xf32>
    %25 = vector.broadcast %12 : f32 to vector<1x8xf32>
    %26 = arith.mulf %1, %25 : vector<1x8xf32>
    %27 = arith.addf %24, %26 : vector<1x8xf32>
    %28 = vector.broadcast %17 : f32 to vector<1x8xf32>
    %29 = arith.mulf %2, %28 : vector<1x8xf32>
    %30 = arith.addf %27, %29 : vector<1x8xf32>
    %31 = vector.broadcast %22 : f32 to vector<1x8xf32>
    %32 = arith.addf %30, %31 : vector<1x8xf32>
    %c0_10 = arith.constant 0 : index
    %c0_11 = arith.constant 0 : index
    %c0_12 = arith.constant 0 : index
    %33 = vector.load %arg3[%c0_10, %c0_11, %c0_12] : memref<1x4x8xf32, #tpu.memory_space<vmem>>, vector<1x1x8xf32>
    %34 = vector.shape_cast %33 : vector<1x1x8xf32> to vector<1x8xf32>
    %35 = vector.shape_cast %32 : vector<1x8xf32> to vector<1x1x8xf32>
    tpu.vector_store %arg3[%c0_10, %c0_11, %c0_12], %35 {strides = array<i32>} : memref<1x4x8xf32, #tpu.memory_space<vmem>>, vector<1x1x8xf32>,
    %c16_i32_13 = arith.constant 16 : i32
    %36 = arith.muli %arg0, %c16_i32_13 : i32
    %c4_i32 = arith.constant 4 : i32
    %37 = arith.addi %36, %c4_i32 : i32
    %c0_i32_14 = arith.constant 0 : i32
    %38 = arith.addi %37, %c0_i32_14 : i32
    %39 = arith.index_cast %38 : i32 to index
    %40 = memref.load %arg1[%39] : memref<32xf32, #tpu.memory_space<smem>>
    %c16_i32_15 = arith.constant 16 : i32
    %41 = arith.muli %arg0, %c16_i32_15 : i32
    %c4_i32_16 = arith.constant 4 : i32
    %42 = arith.addi %41, %c4_i32_16 : i32
    %c1_i32_17 = arith.constant 1 : i32
    %43 = arith.addi %42, %c1_i32_17 : i32
    %44 = arith.index_cast %43 : i32 to index
    %45 = memref.load %arg1[%44] : memref<32xf32, #tpu.memory_space<smem>>
    %c16_i32_18 = arith.constant 16 : i32
    %46 = arith.muli %arg0, %c16_i32_18 : i32
    %c4_i32_19 = arith.constant 4 : i32
    %47 = arith.addi %46, %c4_i32_19 : i32
    %c2_i32_20 = arith.constant 2 : i32
    %48 = arith.addi %47, %c2_i32_20 : i32
    %49 = arith.index_cast %48 : i32 to index
    %50 = memref.load %arg1[%49] : memref<32xf32, #tpu.memory_space<smem>>
    %c16_i32_21 = arith.constant 16 : i32
    %51 = arith.muli %arg0, %c16_i32_21 : i32
    %c4_i32_22 = arith.constant 4 : i32
    %52 = arith.addi %51, %c4_i32_22 : i32
    %c3_i32_23 = arith.constant 3 : i32
    %53 = arith.addi %52, %c3_i32_23 : i32
    %54 = arith.index_cast %53 : i32 to index
    %55 = memref.load %arg1[%54] : memref<32xf32, #tpu.memory_space<smem>>
    %56 = vector.broadcast %40 : f32 to vector<1x8xf32>
    %57 = arith.mulf %0, %56 : vector<1x8xf32>
    %58 = vector.broadcast %45 : f32 to vector<1x8xf32>
    %59 = arith.mulf %1, %58 : vector<1x8xf32>
    %60 = arith.addf %57, %59 : vector<1x8xf32>
    %61 = vector.broadcast %50 : f32 to vector<1x8xf32>
    %62 = arith.mulf %2, %61 : vector<1x8xf32>
    %63 = arith.addf %60, %62 : vector<1x8xf32>
    %64 = vector.broadcast %55 : f32 to vector<1x8xf32>
    %65 = arith.addf %63, %64 : vector<1x8xf32>
    %c0_24 = arith.constant 0 : index
    %c1_25 = arith.constant 1 : index
    %c0_26 = arith.constant 0 : index
    %66 = vector.load %arg3[%c0_24, %c1_25, %c0_26] : memref<1x4x8xf32, #tpu.memory_space<vmem>>, vector<1x1x8xf32>
    %67 = vector.shape_cast %66 : vector<1x1x8xf32> to vector<1x8xf32>
    %68 = vector.shape_cast %65 : vector<1x8xf32> to vector<1x1x8xf32>
    tpu.vector_store %arg3[%c0_24, %c1_25, %c0_26], %68 {strides = array<i32>} : memref<1x4x8xf32, #tpu.memory_space<vmem>>, vector<1x1x8xf32>,
    %c16_i32_27 = arith.constant 16 : i32
    %69 = arith.muli %arg0, %c16_i32_27 : i32
    %c8_i32 = arith.constant 8 : i32
    %70 = arith.addi %69, %c8_i32 : i32
    %c0_i32_28 = arith.constant 0 : i32
    %71 = arith.addi %70, %c0_i32_28 : i32
    %72 = arith.index_cast %71 : i32 to index
    %73 = memref.load %arg1[%72] : memref<32xf32, #tpu.memory_space<smem>>
    %c16_i32_29 = arith.constant 16 : i32
    %74 = arith.muli %arg0, %c16_i32_29 : i32
    %c8_i32_30 = arith.constant 8 : i32
    %75 = arith.addi %74, %c8_i32_30 : i32
    %c1_i32_31 = arith.constant 1 : i32
    %76 = arith.addi %75, %c1_i32_31 : i32
    %77 = arith.index_cast %76 : i32 to index
    %78 = memref.load %arg1[%77] : memref<32xf32, #tpu.memory_space<smem>>
    %c16_i32_32 = arith.constant 16 : i32
    %79 = arith.muli %arg0, %c16_i32_32 : i32
    %c8_i32_33 = arith.constant 8 : i32
    %80 = arith.addi %79, %c8_i32_33 : i32
    %c2_i32_34 = arith.constant 2 : i32
    %81 = arith.addi %80, %c2_i32_34 : i32
    %82 = arith.index_cast %81 : i32 to index
    %83 = memref.load %arg1[%82] : memref<32xf32, #tpu.memory_space<smem>>
    %c16_i32_35 = arith.constant 16 : i32
    %84 = arith.muli %arg0, %c16_i32_35 : i32
    %c8_i32_36 = arith.constant 8 : i32
    %85 = arith.addi %84, %c8_i32_36 : i32
    %c3_i32_37 = arith.constant 3 : i32
    %86 = arith.addi %85, %c3_i32_37 : i32
    %87 = arith.index_cast %86 : i32 to index
    %88 = memref.load %arg1[%87] : memref<32xf32, #tpu.memory_space<smem>>
    %89 = vector.broadcast %73 : f32 to vector<1x8xf32>
    %90 = arith.mulf %0, %89 : vector<1x8xf32>
    %91 = vector.broadcast %78 : f32 to vector<1x8xf32>
    %92 = arith.mulf %1, %91 : vector<1x8xf32>
    %93 = arith.addf %90, %92 : vector<1x8xf32>
    %94 = vector.broadcast %83 : f32 to vector<1x8xf32>
    %95 = arith.mulf %2, %94 : vector<1x8xf32>
    %96 = arith.addf %93, %95 : vector<1x8xf32>
    %97 = vector.broadcast %88 : f32 to vector<1x8xf32>
    %98 = arith.addf %96, %97 : vector<1x8xf32>
    %c0_38 = arith.constant 0 : index
    %c2_39 = arith.constant 2 : index
    %c0_40 = arith.constant 0 : index
    %99 = vector.load %arg3[%c0_38, %c2_39, %c0_40] : memref<1x4x8xf32, #tpu.memory_space<vmem>>, vector<1x1x8xf32>
    %100 = vector.shape_cast %99 : vector<1x1x8xf32> to vector<1x8xf32>
    %101 = vector.shape_cast %98 : vector<1x8xf32> to vector<1x1x8xf32>
    tpu.vector_store %arg3[%c0_38, %c2_39, %c0_40], %101 {strides = array<i32>} : memref<1x4x8xf32, #tpu.memory_space<vmem>>, vector<1x1x8xf32>,
    %c16_i32_41 = arith.constant 16 : i32
    %102 = arith.muli %arg0, %c16_i32_41 : i32
    %c12_i32 = arith.constant 12 : i32
    %103 = arith.addi %102, %c12_i32 : i32
    %c0_i32_42 = arith.constant 0 : i32
    %104 = arith.addi %103, %c0_i32_42 : i32
    %105 = arith.index_cast %104 : i32 to index
    %106 = memref.load %arg1[%105] : memref<32xf32, #tpu.memory_space<smem>>
    %c16_i32_43 = arith.constant 16 : i32
    %107 = arith.muli %arg0, %c16_i32_43 : i32
    %c12_i32_44 = arith.constant 12 : i32
    %108 = arith.addi %107, %c12_i32_44 : i32
    %c1_i32_45 = arith.constant 1 : i32
    %109 = arith.addi %108, %c1_i32_45 : i32
    %110 = arith.index_cast %109 : i32 to index
    %111 = memref.load %arg1[%110] : memref<32xf32, #tpu.memory_space<smem>>
    %c16_i32_46 = arith.constant 16 : i32
    %112 = arith.muli %arg0, %c16_i32_46 : i32
    %c12_i32_47 = arith.constant 12 : i32
    %113 = arith.addi %112, %c12_i32_47 : i32
    %c2_i32_48 = arith.constant 2 : i32
    %114 = arith.addi %113, %c2_i32_48 : i32
    %115 = arith.index_cast %114 : i32 to index
    %116 = memref.load %arg1[%115] : memref<32xf32, #tpu.memory_space<smem>>
    %c16_i32_49 = arith.constant 16 : i32
    %117 = arith.muli %arg0, %c16_i32_49 : i32
    %c12_i32_50 = arith.constant 12 : i32
    %118 = arith.addi %117, %c12_i32_50 : i32
    %c3_i32_51 = arith.constant 3 : i32
    %119 = arith.addi %118, %c3_i32_51 : i32
    %120 = arith.index_cast %119 : i32 to index
    %121 = memref.load %arg1[%120] : memref<32xf32, #tpu.memory_space<smem>>
    %122 = vector.broadcast %106 : f32 to vector<1x8xf32>
    %123 = arith.mulf %0, %122 : vector<1x8xf32>
    %124 = vector.broadcast %111 : f32 to vector<1x8xf32>
    %125 = arith.mulf %1, %124 : vector<1x8xf32>
    %126 = arith.addf %123, %125 : vector<1x8xf32>
    %127 = vector.broadcast %116 : f32 to vector<1x8xf32>
    %128 = arith.mulf %2, %127 : vector<1x8xf32>
    %129 = arith.addf %126, %128 : vector<1x8xf32>
    %130 = vector.broadcast %121 : f32 to vector<1x8xf32>
    %131 = arith.addf %129, %130 : vector<1x8xf32>
    %c0_52 = arith.constant 0 : index
    %c3 = arith.constant 3 : index
    %c0_53 = arith.constant 0 : index
    %132 = vector.load %arg3[%c0_52, %c3, %c0_53] : memref<1x4x8xf32, #tpu.memory_space<vmem>>, vector<1x1x8xf32>
    %133 = vector.shape_cast %132 : vector<1x1x8xf32> to vector<1x8xf32>
    %134 = vector.shape_cast %131 : vector<1x8xf32> to vector<1x1x8xf32>
    tpu.vector_store %arg3[%c0_52, %c3, %c0_53], %134 {strides = array<i32>} : memref<1x4x8xf32, #tpu.memory_space<vmem>>, vector<1x1x8xf32>,
    return
  }
  func.func @transform_0(%arg0: i32) -> i32 {
    %c0_i32 = arith.constant 0 : i32
    %c0_i32_0 = arith.constant 0 : i32
    return %c0_i32 : i32
  }
  func.func @transform_1(%arg0: i32) -> (i32, i32) {
    %c0_i32 = arith.constant 0 : i32
    %c0_i32_0 = arith.constant 0 : i32
    %c0_i32_1 = arith.constant 0 : i32
    return %c0_i32, %c0_i32_0 : i32, i32
  }
  func.func @transform_2(%arg0: i32) -> (i32, i32, i32) {
    %c0_i32 = arith.constant 0 : i32
    %c0_i32_0 = arith.constant 0 : i32
    %c0_i32_1 = arith.constant 0 : i32
    return %arg0, %c0_i32, %c0_i32_0 : i32, i32, i32
  }
}

</mosaic_0001>

<llo_original>
// kernel: tpu_custom_call.1
$region0: #{tpu_custom_call.1}
  #allocation0 [shape = 'u32[]', space=smem, size = 0x4, offset = 0x4, fixed_abs, tag = 'smem constant byte address 0x4 - core index']
  #allocation1 [shape = 'u32[144,128]{1,0:T(1,128)}', space=vmem, size = 0x12000, scoped, tag = 'internal scratch']
  %s0 = inlined_call_operand.hbm [shape: f32[32], index: 0, kind: input, shape index: {}]
  %s1 = inlined_call_operand.hbm [shape: f32[3,8], index: 1, kind: input, shape index: {}]
  %s2 = inlined_call_operand.hbm [shape: f32[2,4,8], index: 2, kind: output, shape index: {}]
  %s3 = sld [smem:[#allocation0]]
  $region49: #{tpu_custom_call.1} parent=0
    _
  %s5 = ssub.s32 1, %s3
  %s6 = scalar_select 0, %s5, %s3
  $region1: #{tpu_custom_call.1} parent=0
    #allocation2 [shape = 'u8[512]{0}', space=smem, size = 0x200, scoped, tag = 'input window, operand 0, single buffered']
    #allocation3 [shape = 's32[2]{0}', space=sflag, size = 0x8, scoped, tag = 'scoped memory for tpu_custom_call.1']
    #allocation4 [shape = 's32[2]{0}', space=sflag, size = 0x8, scoped, tag = 'scoped memory for tpu_custom_call.1']
    #allocation5 [shape = 's32[2]{0}', space=sflag, size = 0x8, scoped, tag = 'scoped memory for tpu_custom_call.1']
    #allocation6 [shape = 'u8[2048]{0}', space=vmem, size = 0x800, scoped, tag = 'input window, operand 1, single buffered']
    #allocation7 [shape = 'u8[4096]{0}', space=vmem, size = 0x1000, scoped, tag = 'output window, operand 0']
    %7 = vsyncpa [#allocation5], 0
    %8 = vsyncpa [#allocation3], 0
    %9 = vsyncpa [#allocation4], 0
    %s10 = scalar_lea.sflag [#allocation4], 1
    %11 = vsyncpa %s10, 0
    loop: start=0, step=1, limit=4
    $region2: #{tpu_custom_call.1} parent=1 // loop_pre_header
      _
    $region3: #{tpu_custom_call.1} parent=1 // loop_header
      %s13 = sphi 0, %s17
      %p14 = scmp.ge.s32.totalorder %s13, 4
      %s21 = sphi 0, %s21
      %s23 = sphi 0, %s21
      %s24 = sphi 0, %s23
      %s38 = sphi 0, %s24
      %s42 = sphi 0, %s42
      %s44 = sphi 0, %s42
      %s45 = sphi 0, %s44
      %s59 = sphi 0, %s45
      %s65 = sphi 0, %s67
      %s68 = sphi 0, %s65
      %s69 = sphi 0, %s68
      %s85 = sphi 0, %s69
    $region4: #{tpu_custom_call.1} parent=1 // loop_header_branch
      %16 = sbr.rel (%p14) target = $region8
    $region5: #{tpu_custom_call.1} parent=1 // loop_body
      %s18 = ssub.s32 %s13, 1
      %s19 = ssub.s32 %s13, 2
      %s20 = sadd.s32 %s13, 1
      %s22 = sadd.s32 %s21, 1
      %p25 = scmp.eq.s32.totalorder %s13, 1
      %p26 = scmp.ne.s32.totalorder %s21, %s23
      %p27 = scmp.eq.s32.totalorder %s13, 0
      %p28 = por %p26, %p27
      %p29 = scmp.ne.s32.totalorder %s21, %s23
      %p30 = scmp.eq.s32.totalorder %s18, 1
      %p31 = por %p29, %p30
      %p32 = scmp.ne.s32.totalorder %s23, %s24
      %p33 = scmp.eq.s32.totalorder %s18, 0
      %p34 = por %p32, %p33
      %p35 = scmp.ne.s32.totalorder %s23, %s24
      %p36 = scmp.eq.s32.totalorder %s19, 1
      %p37 = por %p35, %p36
      %p39 = scmp.ne.s32.totalorder %s24, %s38
      %p40 = scmp.eq.s32.totalorder %s19, 0
      %p41 = por %p39, %p40
      %s43 = sadd.s32 %s42, 1
      %p46 = scmp.eq.s32.totalorder %s13, 1
      %p47 = scmp.ne.s32.totalorder %s42, %s44
      %p48 = scmp.eq.s32.totalorder %s13, 0
      %p49 = por %p47, %p48
      %p50 = scmp.ne.s32.totalorder %s42, %s44
      %p51 = scmp.eq.s32.totalorder %s18, 1
      %p52 = por %p50, %p51
      %p53 = scmp.ne.s32.totalorder %s44, %s45
      %p54 = scmp.eq.s32.totalorder %s18, 0
      %p55 = por %p53, %p54
      %p56 = scmp.ne.s32.totalorder %s44, %s45
      %p57 = scmp.eq.s32.totalorder %s19, 1
      %p58 = por %p56, %p57
      %p60 = scmp.ne.s32.totalorder %s45, %s59
      %p61 = scmp.eq.s32.totalorder %s19, 0
      %p62 = por %p60, %p61
      %s63 = ssub.s32 %s13, %s20
      %p64 = scmp.eq.s32.totalorder %s63, 0
      %s66 = sadd.s32 %s65, 1
      %s67 = scalar_select %p64, %s65, %s66
      %p70 = pneg %p64
      %p71 = scmp.eq.s32.totalorder %s13, 1
      %p72 = por %p70, %p71
      %p73 = scmp.ne.s32.totalorder %s65, %s68
      %p74 = scmp.eq.s32.totalorder %s13, 0
      %p75 = por %p73, %p74
      %p76 = scmp.ne.s32.totalorder %s65, %s68
      %p77 = scmp.eq.s32.totalorder %s18, 1
      %p78 = por %p76, %p77
      %p79 = scmp.ne.s32.totalorder %s68, %s69
      %p80 = scmp.eq.s32.totalorder %s18, 0
      %p81 = por %p79, %p80
      %p82 = scmp.ne.s32.totalorder %s68, %s69
      %p83 = scmp.eq.s32.totalorder %s19, 1
      %p84 = por %p82, %p83
      %p86 = scmp.ne.s32.totalorder %s69, %s85
      %p87 = scmp.eq.s32.totalorder %s19, 0
      %p88 = por %p86, %p87
      %p89 = scmp.le.s32.totalorder 1, %s13
      %p90 = scmp.lt.s32.totalorder %s13, 3
      %p91 = pnand %p89, %p90
      %p92 = pneg %p91
      // Predicated region
      $region9: #{tpu_custom_call.1} parent=5 // pred_check
        _
      $region10: #{tpu_custom_call.1} parent=5 // pred_check_branch
        %94 = sbr.rel (%p91) target = $region12
      $region11: #{tpu_custom_call.1} parent=5 // pred_region
        %s95 = ssub.s32 %s13, 1
        // Predicated region
        $region13: #{tpu_custom_call.1} parent=11 // pred_check
          %p96 = pneg %p34
        $region14: #{tpu_custom_call.1} parent=11 // pred_check_branch
          %98 = sbr.rel (%p96) target = $region16
        $region15: #{tpu_custom_call.1} parent=11 // pred_region
          %s100 = ssub.s32 16, 16
          %101 = vsyncadd [#allocation5], %s100
          %104 = dma.hbm_to_smem %s0, 16, [#allocation2], [#allocation5]
        $region16: #{tpu_custom_call.1} parent=11 // pred_fallthru
          _
        // Predicated region
        $region17: #{tpu_custom_call.1} parent=11 // pred_check
          %p105 = pneg %p55
        $region18: #{tpu_custom_call.1} parent=11 // pred_check_branch
          %107 = sbr.rel (%p105) target = $region20
        $region19: #{tpu_custom_call.1} parent=11 // pred_region
          %s109 = ssub.s32 64, 64
          %110 = vsyncadd [#allocation3], %s109
          %s112 = sshll.u32 [#allocation6], 4
          %s113 = int_to_ptr.vmem [resolvable:$true] %s112
          %115 = dma.hbm_to_vmem [thread:$0]  %s1, 64, %s113, [#allocation3]
        $region20: #{tpu_custom_call.1} parent=11 // pred_fallthru
          _
      $region12: #{tpu_custom_call.1} parent=5 // pred_fallthru
        _
      %p116 = scmp.lt.s32.totalorder %s13, 2
      // Predicated region
      $region21: #{tpu_custom_call.1} parent=5 // pred_check
        %p117 = pneg %p116
      $region22: #{tpu_custom_call.1} parent=5 // pred_check_branch
        %119 = sbr.rel (%p117) target = $region24
      $region23: #{tpu_custom_call.1} parent=5 // pred_region
        _
      $region24: #{tpu_custom_call.1} parent=5 // pred_fallthru
        _
      %p120 = scmp.le.s32.totalorder 1, %s13
      %p121 = scmp.lt.s32.totalorder %s13, 3
      %p122 = pnand %p120, %p121
      %p123 = pneg %p122
      // Predicated region
      $region25: #{tpu_custom_call.1} parent=5 // pred_check
        _
      $region26: #{tpu_custom_call.1} parent=5 // pred_check_branch
        %125 = sbr.rel (%p122) target = $region28
      $region27: #{tpu_custom_call.1} parent=5 // pred_region
        %s126 = ssub.s32 %s13, 1
        // Predicated region
        $region29: #{tpu_custom_call.1} parent=27 // pred_check
          %p127 = pneg %p34
        $region30: #{tpu_custom_call.1} parent=27 // pred_check_branch
          %129 = sbr.rel (%p127) target = $region32
        $region31: #{tpu_custom_call.1} parent=27 // pred_region
          %130 = dma.done [#allocation5], 16
        $region32: #{tpu_custom_call.1} parent=27 // pred_fallthru
          _
        // Predicated region
        $region33: #{tpu_custom_call.1} parent=27 // pred_check
          %p131 = pneg %p55
        $region34: #{tpu_custom_call.1} parent=27 // pred_check_branch
          %133 = sbr.rel (%p131) target = $region36
        $region35: #{tpu_custom_call.1} parent=27 // pred_region
          %134 = dma.done [#allocation3], 64
        $region36: #{tpu_custom_call.1} parent=27 // pred_fallthru
          _
        %135 = sfence
        %p136 = pneg %p34
        %p137 = pneg %p31
        %p138 = pneg %p55
        %p139 = pneg %p52
        %p140 = pneg %p81
        %p141 = pneg %p78
        %s142 = sand.u32 %s68, 1
        %s143 = scalar_lea.sflag [#allocation4], %s142
        %s144 = sand.u32 %s68, 1
        %s145 = smul.addr %s144, 4
        %s146 = scalar_lea.vmem [#allocation7], %s145
        %v147 = vld [vmem:[#allocation6] sm:$0x1]
        %v148 = vld [vmem:[#allocation6 + $0x1] sm:$0x1]
        %v149 = vld [vmem:[#allocation6 + $0x2] sm:$0x1]
        %s150 = smul.u32 %s18, 16
        %s151 = sld [smem:[#allocation2 + %s150]]
        %s152 = sadd.s32 %s150, 1
        %s153 = sld [smem:[#allocation2 + %s152]]
        %s154 = sadd.s32 %s150, 2
        %s155 = sld [smem:[#allocation2 + %s154]]
        %s156 = sadd.s32 %s150, 3
        %s157 = sld [smem:[#allocation2 + %s156]]
        %v158 = vstv %s151
        %v159 = vmul.f32 %v147, %v158
        %v160 = vstv %s153
        %v161 = vmul.f32 %v148, %v160
        %v162 = vadd.f32 %v159, %v161
        %v163 = vstv %s155
        %v164 = vmul.f32 %v149, %v163
        %v165 = vadd.f32 %v162, %v164
        %v166 = vstv %s157
        %v167 = vadd.f32 %v165, %v166
        %vm168 = vcmask 57344
        %169 = vst.msk [vmem:[%s146] sm:$0x1] %vm168, %v167
        %s170 = sadd.s32 %s150, 4
        %s171 = sld [smem:[#allocation2 + %s170]]
        %s172 = sadd.s32 %s150, 5
        %s173 = sld [smem:[#allocation2 + %s172]]
        %s174 = sadd.s32 %s150, 6
        %s175 = sld [smem:[#allocation2 + %s174]]
        %s176 = sadd.s32 %s150, 7
        %s177 = sld [smem:[#allocation2 + %s176]]
        %v178 = vstv %s171
        %v179 = vmul.f32 %v147, %v178
        %v180 = vstv %s173
        %v181 = vmul.f32 %v148, %v180
        %v182 = vadd.f32 %v179, %v181
        %v183 = vstv %s175
        %v184 = vmul.f32 %v149, %v183
        %v185 = vadd.f32 %v182, %v184
        %v186 = vstv %s177
        %v187 = vadd.f32 %v185, %v186
        %188 = vst.msk [vmem:[%s146 + $0x1] sm:$0x1] %vm168, %v187
        %s189 = sadd.s32 %s150, 8
        %s190 = sld [smem:[#allocation2 + %s189]]
        %s191 = sadd.s32 %s150, 9
        %s192 = sld [smem:[#allocation2 + %s191]]
        %s193 = sadd.s32 %s150, 10
        %s194 = sld [smem:[#allocation2 + %s193]]
        %s195 = sadd.s32 %s150, 11
        %s196 = sld [smem:[#allocation2 + %s195]]
        %v197 = vstv %s190
        %v198 = vmul.f32 %v147, %v197
        %v199 = vstv %s192
        %v200 = vmul.f32 %v148, %v199
        %v201 = vadd.f32 %v198, %v200
        %v202 = vstv %s194
        %v203 = vmul.f32 %v149, %v202
        %v204 = vadd.f32 %v201, %v203
        %v205 = vstv %s196
        %v206 = vadd.f32 %v204, %v205
        %207 = vst.msk [vmem:[%s146 + $0x2] sm:$0x1] %vm168, %v206
        %s208 = sadd.s32 %s150, 12
        %s209 = sld [smem:[#allocation2 + %s208]]
        %s210 = sadd.s32 %s150, 13
        %s211 = sld [smem:[#allocation2 + %s210]]
        %s212 = sadd.s32 %s150, 14
        %s213 = sld [smem:[#allocation2 + %s212]]
        %s214 = sadd.s32 %s150, 15
        %s215 = sld [smem:[#allocation2 + %s214]]
        %v216 = vstv %s209
        %v217 = vmul.f32 %v147, %v216
        %v218 = vstv %s211
        %v219 = vmul.f32 %v148, %v218
        %v220 = vadd.f32 %v217, %v219
        %v221 = vstv %s213
        %v222 = vmul.f32 %v149, %v221
        %v223 = vadd.f32 %v220, %v222
        %v224 = vstv %s215
        %v225 = vadd.f32 %v223, %v224
        %226 = vst.msk [vmem:[%s146 + $0x3] sm:$0x1] %vm168, %v225
        %s227 = sand.u32 %s68, 1
        %s228 = scalar_lea.sflag [#allocation4], %s227
        %s229 = sand.u32 %s68, 1
        %s230 = smul.addr %s229, 4
        %s231 = scalar_lea.vmem [#allocation7], %s230
        // Predicated region
        $region37: #{tpu_custom_call.1} parent=27 // pred_check
          %p232 = pneg %p78
        $region38: #{tpu_custom_call.1} parent=27 // pred_check_branch
          %234 = sbr.rel (%p232) target = $region40
        $region39: #{tpu_custom_call.1} parent=27 // pred_region
          %s236 = ssub.s32 64, 64
          %237 = vsyncadd %s228, %s236
          %s238 = smul.addr %s18, 64
          %s239 = scalar_lea.hbm %s2, %s238
          %s241 = sshll.u32 %s231, 4
          %s242 = int_to_ptr.vmem [resolvable:$true] %s241
          %244 = dma.vmem_to_hbm [thread:$0]  %s242, 64, %s239, %s228
        $region40: #{tpu_custom_call.1} parent=27 // pred_fallthru
          _
      $region28: #{tpu_custom_call.1} parent=5 // pred_fallthru
        _
      %p245 = scmp.le.s32.totalorder 2, %s13
      // Predicated region
      $region41: #{tpu_custom_call.1} parent=5 // pred_check
        %p246 = pneg %p245
      $region42: #{tpu_custom_call.1} parent=5 // pred_check_branch
        %248 = sbr.rel (%p246) target = $region44
      $region43: #{tpu_custom_call.1} parent=5 // pred_region
        %s249 = ssub.s32 %s13, 2
        // Predicated region
        $region45: #{tpu_custom_call.1} parent=43 // pred_check
          %p250 = pneg %p84
        $region46: #{tpu_custom_call.1} parent=43 // pred_check_branch
          %252 = sbr.rel (%p250) target = $region48
        $region47: #{tpu_custom_call.1} parent=43 // pred_region
          %s253 = sand.u32 %s69, 1
          %s254 = scalar_lea.sflag [#allocation4], %s253
          %s255 = sand.u32 %s69, 1
          %s256 = smul.addr %s255, 4
          %s257 = scalar_lea.vmem [#allocation7], %s256
          %258 = dma.done %s254, 64
        $region48: #{tpu_custom_call.1} parent=43 // pred_fallthru
          _
      $region44: #{tpu_custom_call.1} parent=5 // pred_fallthru
        _
    $region6: #{tpu_custom_call.1} parent=1 // loop_footer
      %s17 = sadd.s32 1, %s13
    $region7: #{tpu_custom_call.1} parent=1 // loop_footer_branch
      %12 = sbr.rel target = $region3
    $region8: #{tpu_custom_call.1} parent=1 // loop_exit
      _
    %259 = vsyncpa [#allocation3], 1
    %s260 = scalar_lea.sflag [#allocation3], 1
    %261 = vsyncpa %s260, 1
    %262 = vsyncpa [#allocation4], 1
    %s263 = scalar_lea.sflag [#allocation4], 1
    %264 = vsyncpa %s263, 1
    %265 = vsyncpa [#allocation5], 1
    %s266 = scalar_lea.sflag [#allocation5], 1
    %267 = vsyncpa %s266, 1

</llo_original>
